<compile_context>
chip_gen: v7x
topology: tpu7x:2x2x1
jax: 0.10.0
libtpu: 0.0.40
codegen_flags: <defaults>
</compile_context>

<pallas_src>
import jax
import jax.numpy as jnp
from jax import lax
from jax.experimental import pallas as pl
from jax.experimental.pallas import tpu as pltpu


def _conv_bn_relu_kernel(p_ref, w_ref, o_ref):
    # p_ref: (1, K+1, TM)   bf16 im2col patches + ones-row (one image / M tile)
    # w_ref: (C_out, K+1)   bf16 BN-scaled weights + folded-bias column
    # o_ref: (1, C_out, TM) f32 output tile (lane-dense, TM % 128 == 0)
    acc = jnp.dot(w_ref[...], p_ref[0], preferred_element_type=jnp.float32)
    o_ref[0] = jnp.maximum(acc, 0.0).astype(o_ref.dtype)   # ReLU + store only


@jax.jit
def conv_block_forward(x_nchw, w_oihw, conv_bias, bn_gamma, bn_beta,
                       bn_mean, bn_var, eps=1e-5):
    """ConvBlock forward: relu(bn(conv(x))), stride=1, padding=0 (VALID)."""
    n, c_in, h, w = x_nchw.shape
    c_out, c_in_w, kh, kw = w_oihw.shape
    assert c_in_w == c_in, "weight C_in must match input C_in"
    oh = h - kh + 1
    ow = w - kw + 1
    m = oh * ow
    k = kh * kw * c_in
    m_pad = ((m + 127) // 128) * 128          # lane-dense, unmasked stores
    kk = k + 1                                # + ones-row / bias column

    # Fold BatchNorm (eval mode) + conv bias into the weights / a bias column.
    scale = bn_gamma / jnp.sqrt(bn_var + eps)                 # (C_out,)
    bias = (conv_bias - bn_mean) * scale + bn_beta            # (C_out,)

    # Weights OIHW -> (C_out, K) with K index = (i*KW + j)*C_in + ci, BN scale
    # folded in, bias appended as one extra column (matched by a ones-row in
    # the patches so the bias lands inside the GEMM accumulate).
    w2 = jnp.transpose(w_oihw, (0, 2, 3, 1)).reshape(c_out, k)
    w2 = jnp.concatenate([w2 * scale[:, None], bias[:, None]], axis=1)
    w2 = w2.astype(jnp.bfloat16)                              # (C_out, K+1)

    # im2col in the wrapper (sanctioned glue), lane-dense orientation:
    # patches[nb, (i*KW + j)*C_in + ci, oy*OW + ox] = x[nb, ci, oy + i, ox + j]
    taps = [x_nchw[:, :, i:i + oh, j:j + ow]                  # (N, C_in, OH, OW)
            for i in range(kh) for j in range(kw)]
    patches = jnp.stack(taps, axis=1).reshape(n, k, m)        # (N, K, M)
    patches = jnp.concatenate(
        [patches, jnp.ones((n, 1, m), patches.dtype)], axis=1)   # ones-row
    patches = jnp.pad(patches, ((0, 0), (0, 0), (0, m_pad - m)))  # pad lanes
    patches = patches.astype(jnp.bfloat16)                    # (N, K+1, M_pad)

    # Always expose a parallel grid so multi-TensorCore chips (v7x) shard it:
    # one image per step when N > 1 (widest possible matmul in M per step,
    # which also amortizes MXU push/drain on v6e); otherwise split the padded
    # M into 128-lane tiles so two cores still get balanced work for N == 1.
    m_tile = m_pad if n > 1 else min(m_pad, 128)
    grid = (n, m_pad // m_tile)

    out = pl.pallas_call(
        _conv_bn_relu_kernel,
        out_shape=jax.ShapeDtypeStruct((n, c_out, m_pad), jnp.float32),
        grid_spec=pl.GridSpec(
            grid=grid,
            in_specs=[
                pl.BlockSpec((1, kk, m_tile), lambda b, mi: (b, 0, mi)),
                pl.BlockSpec((c_out, kk), lambda b, mi: (0, 0)),
            ],
            out_specs=pl.BlockSpec((1, c_out, m_tile),
                                   lambda b, mi: (b, 0, mi)),
        ),
        compiler_params=pltpu.CompilerParams(
            dimension_semantics=("parallel", "parallel")),
    )(patches, w2)

    # (N, C_out, M_pad) -> drop lane padding -> NCHW (reshape only, no transpose).
    return out[:, :, :m].reshape(n, c_out, oh, ow)


def _reference(x_nchw, w_oihw, conv_bias, bn_gamma, bn_beta, bn_mean, bn_var,
               eps=1e-5):
    y = lax.conv_general_dilated(
        x_nchw.astype(jnp.float32), w_oihw.astype(jnp.float32),
        window_strides=(1, 1), padding="VALID",
        dimension_numbers=("NCHW", "OIHW", "NCHW"))
    y = y + conv_bias.reshape(1, -1, 1, 1)
    y = (y - bn_mean.reshape(1, -1, 1, 1)) / jnp.sqrt(
        bn_var.reshape(1, -1, 1, 1) + eps)
    y = y * bn_gamma.reshape(1, -1, 1, 1) + bn_beta.reshape(1, -1, 1, 1)
    return jnp.maximum(y, 0.0)


if __name__ == "__main__":
    # ConvBlock(in_channels=4, out_channels=8, kernel_size=3), input [2, 4, 16, 16]
    N, C_IN, H, W = 2, 4, 16, 16
    C_OUT, KH, KW = 8, 3, 3

    key = jax.random.PRNGKey(0)
    k_x, k_w, k_b, k_g, k_be, k_m, k_v = jax.random.split(key, 7)

    x = jax.random.normal(k_x, (N, C_IN, H, W), dtype=jnp.float32)
    w = jax.random.normal(k_w, (C_OUT, C_IN, KH, KW), dtype=jnp.float32) * 0.1
    conv_bias = jax.random.normal(k_b, (C_OUT,), dtype=jnp.float32) * 0.1
    bn_gamma = 1.0 + 0.1 * jax.random.normal(k_g, (C_OUT,), dtype=jnp.float32)
    bn_beta = 0.1 * jax.random.normal(k_be, (C_OUT,), dtype=jnp.float32)
    bn_mean = 0.1 * jax.random.normal(k_m, (C_OUT,), dtype=jnp.float32)
    bn_var = jnp.abs(1.0 + 0.1 * jax.random.normal(k_v, (C_OUT,), dtype=jnp.float32))

    out = conv_block_forward(x, w, conv_bias, bn_gamma, bn_beta, bn_mean, bn_var)
    out = jax.block_until_ready(out)

    ref = _reference(x, w, conv_bias, bn_gamma, bn_beta, bn_mean, bn_var)
    assert out.shape == (N, C_OUT, H - KH + 1, W - KW + 1)
    # bf16 streamed operands (f32 accumulate) -> bf16-appropriate tolerance.
    assert jnp.allclose(out, ref, atol=2e-2, rtol=2e-2)

    print("KERNEL_OK")
</pallas_src>

<mosaic_0001>
module attributes {stable_mosaic.version = 11 : i64} {
  func.func @_conv_bn_relu_kernel(%arg0: i32, %arg1: i32, %arg2: memref<1x37x256xbf16, #tpu.memory_space<vmem>>, %arg3: memref<8x37xbf16, #tpu.memory_space<vmem>>, %arg4: memref<1x8x256xf32, #tpu.memory_space<vmem>>) attributes {dimension_semantics = [#tpu.dimension_semantics<parallel>, #tpu.dimension_semantics<parallel>], iteration_bounds = array<i64: 2, 1>, scalar_prefetch = 0 : i64, scratch_operands = 0 : i64, tpu.core_type = #tpu.core_type<tc>, window_params = [{transform_indices = @transform_0, window_bounds = array<i64: 1, 37, 256>}, {pipeline_mode = #tpu.pipeline_mode<synchronous>, transform_indices = @transform_1, window_bounds = array<i64: 8, 37>}, {transform_indices = @transform_2, window_bounds = array<i64: 1, 8, 256>}]} {
    %c0 = arith.constant 0 : index
    %c0_0 = arith.constant 0 : index
    %0 = vector.load %arg3[%c0, %c0_0] : memref<8x37xbf16, #tpu.memory_space<vmem>>, vector<8x37xbf16>
    %c0_1 = arith.constant 0 : index
    %c0_2 = arith.constant 0 : index
    %c0_3 = arith.constant 0 : index
    %1 = vector.load %arg2[%c0_1, %c0_2, %c0_3] : memref<1x37x256xbf16, #tpu.memory_space<vmem>>, vector<1x37x256xbf16>
    %2 = vector.shape_cast %1 : vector<1x37x256xbf16> to vector<37x256xbf16>
    %cst = arith.constant dense<0.000000e+00> : vector<8x256xf32>
    %3 = tpu.matmul %0, %2, %cst {dimension_numbers = #tpu.dot_dimension_numbers<[1], [0], [0], [1], [0, 0, 1, 1], [], []>} : vector<8x37xbf16>, vector<37x256xbf16>, vector<8x256xf32> -> vector<8x256xf32>
    %cst_4 = arith.constant 0.000000e+00 : f32
    %4 = vector.broadcast %cst_4 : f32 to vector<8x256xf32>
    %5 = arith.maximumf %3, %4 : vector<8x256xf32>
    %c0_5 = arith.constant 0 : index
    %c0_6 = arith.constant 0 : index
    %c0_7 = arith.constant 0 : index
    %6 = vector.load %arg4[%c0_5, %c0_6, %c0_7] : memref<1x8x256xf32, #tpu.memory_space<vmem>>, vector<1x8x256xf32>
    %7 = vector.shape_cast %6 : vector<1x8x256xf32> to vector<8x256xf32>
    %8 = vector.shape_cast %5 : vector<8x256xf32> to vector<1x8x256xf32>
    tpu.vector_store %arg4[%c0_5, %c0_6, %c0_7], %8 {strides = array<i32>} : memref<1x8x256xf32, #tpu.memory_space<vmem>>, vector<1x8x256xf32>,
    return
  }
  func.func @transform_0(%arg0: i32, %arg1: i32) -> (i32, i32, i32) {
    %c0_i32 = arith.constant 0 : i32
    %c0_i32_0 = arith.constant 0 : i32
    return %arg0, %c0_i32, %arg1 : i32, i32, i32
  }
  func.func @transform_1(%arg0: i32, %arg1: i32) -> (i32, i32) {
    %c0_i32 = arith.constant 0 : i32
    %c0_i32_0 = arith.constant 0 : i32
    %c0_i32_1 = arith.constant 0 : i32
    return %c0_i32, %c0_i32_0 : i32, i32
  }
  func.func @transform_2(%arg0: i32, %arg1: i32) -> (i32, i32, i32) {
    %c0_i32 = arith.constant 0 : i32
    %c0_i32_0 = arith.constant 0 : i32
    return %arg0, %c0_i32, %arg1 : i32, i32, i32
  }
}

</mosaic_0001>

<llo_original>
// kernel: conv_block_forward.1
$region0: #{conv_block_forward.1}
  #allocation0 [shape = 'u32[]', space=smem, size = 0x4, offset = 0x4, fixed_abs, tag = 'smem constant byte address 0x4 - core index']
  #allocation1 [shape = 'u32[144,128]{1,0:T(1,128)}', space=vmem, size = 0x12000, scoped, tag = 'internal scratch']
  %s0 = inlined_call_operand.vmem [shape: bf16[2,37,256], index: 0, kind: input, shape index: {}]
  %s1 = inlined_call_operand.vmem [shape: bf16[8,37], index: 1, kind: input, shape index: {}]
  %s2 = inlined_call_operand.vmem [shape: f32[2,8,256], index: 2, kind: output, shape index: {}]
  %s3 = sld [smem:[#allocation0]]
  $region41: #{conv_block_forward.1} parent=0
    _
  %s5 = ssub.s32 1, %s3
  %s6 = scalar_select 0, %s5, %s3
  loop: start=0, step=1, limit=4
  $region2: #{conv_block_forward.1} parent=0 // loop_pre_header
    _
  $region3: #{conv_block_forward.1} parent=0 // loop_header
    %s8 = sphi 0, %s12
    %p9 = scmp.ge.s32.totalorder %s8, 4
    %s15 = sphi 0, %s27
    %s16 = sphi 0, %s23
    %s17 = sphi 0, %s15
    %s18 = sphi 0, %s16
    %s19 = sphi 0, %s17
    %s20 = sphi 0, %s18
    %s32 = sphi 0, %s34
    %s35 = sphi 0, %s32
    %s36 = sphi 0, %s35
    %s52 = sphi 0, %s36
    %s56 = sphi 0, %s56
    %s58 = sphi 0, %s56
    %s59 = sphi 0, %s58
    %s73 = sphi 0, %s59
    %s81 = sphi 0, %s83
    %s84 = sphi 0, %s81
    %s85 = sphi 0, %s84
    %s101 = sphi 0, %s85
  $region4: #{conv_block_forward.1} parent=0 // loop_header_branch
    %11 = sbr.rel (%p9) target = $region8
  $region5: #{conv_block_forward.1} parent=0 // loop_body
    %s13 = ssub.s32 %s8, 1
    %s14 = ssub.s32 %s8, 2
    %s21 = sadd.s32 1, %s16
    %p22 = scmp.ge.s32.totalorder %s21, 1
    %s23 = scalar_select %p22, 0, %s21
    %s24 = sadd.s32 1, %s15
    %s25 = scalar_select %p22, %s24, %s15
    %p26 = scmp.ge.s32.totalorder %s25, 2
    %s27 = scalar_select %p26, 0, %s25
    %s28 = ssub.s32 %s15, %s27
    %s29 = ssub.s32 %s16, %s23
    %s30 = sor.u32 %s28, %s29
    %p31 = scmp.eq.s32.totalorder %s30, 0
    %s33 = sadd.s32 %s32, 1
    %s34 = scalar_select %p31, %s32, %s33
    %p37 = pneg %p31
    %p38 = scmp.eq.s32.totalorder %s8, 1
    %p39 = por %p37, %p38
    %p40 = scmp.ne.s32.totalorder %s32, %s35
    %p41 = scmp.eq.s32.totalorder %s8, 0
    %p42 = por %p40, %p41
    %p43 = scmp.ne.s32.totalorder %s32, %s35
    %p44 = scmp.eq.s32.totalorder %s13, 1
    %p45 = por %p43, %p44
    %p46 = scmp.ne.s32.totalorder %s35, %s36
    %p47 = scmp.eq.s32.totalorder %s13, 0
    %p48 = por %p46, %p47
    %p49 = scmp.ne.s32.totalorder %s35, %s36
    %p50 = scmp.eq.s32.totalorder %s14, 1
    %p51 = por %p49, %p50
    %p53 = scmp.ne.s32.totalorder %s36, %s52
    %p54 = scmp.eq.s32.totalorder %s14, 0
    %p55 = por %p53, %p54
    %s57 = sadd.s32 %s56, 1
    %p60 = scmp.eq.s32.totalorder %s8, 1
    %p61 = scmp.ne.s32.totalorder %s56, %s58
    %p62 = scmp.eq.s32.totalorder %s8, 0
    %p63 = por %p61, %p62
    %p64 = scmp.ne.s32.totalorder %s56, %s58
    %p65 = scmp.eq.s32.totalorder %s13, 1
    %p66 = por %p64, %p65
    %p67 = scmp.ne.s32.totalorder %s58, %s59
    %p68 = scmp.eq.s32.totalorder %s13, 0
    %p69 = por %p67, %p68
    %p70 = scmp.ne.s32.totalorder %s58, %s59
    %p71 = scmp.eq.s32.totalorder %s14, 1
    %p72 = por %p70, %p71
    %p74 = scmp.ne.s32.totalorder %s59, %s73
    %p75 = scmp.eq.s32.totalorder %s14, 0
    %p76 = por %p74, %p75
    %s77 = ssub.s32 %s15, %s27
    %s78 = ssub.s32 %s16, %s23
    %s79 = sor.u32 %s77, %s78
    %p80 = scmp.eq.s32.totalorder %s79, 0
    %s82 = sadd.s32 %s81, 1
    %s83 = scalar_select %p80, %s81, %s82
    %p86 = pneg %p80
    %p87 = scmp.eq.s32.totalorder %s8, 1
    %p88 = por %p86, %p87
    %p89 = scmp.ne.s32.totalorder %s81, %s84
    %p90 = scmp.eq.s32.totalorder %s8, 0
    %p91 = por %p89, %p90
    %p92 = scmp.ne.s32.totalorder %s81, %s84
    %p93 = scmp.eq.s32.totalorder %s13, 1
    %p94 = por %p92, %p93
    %p95 = scmp.ne.s32.totalorder %s84, %s85
    %p96 = scmp.eq.s32.totalorder %s13, 0
    %p97 = por %p95, %p96
    %p98 = scmp.ne.s32.totalorder %s84, %s85
    %p99 = scmp.eq.s32.totalorder %s14, 1
    %p100 = por %p98, %p99
    %p102 = scmp.ne.s32.totalorder %s85, %s101
    %p103 = scmp.eq.s32.totalorder %s14, 0
    %p104 = por %p102, %p103
    %p105 = scmp.le.s32.totalorder 1, %s8
    %p106 = scmp.lt.s32.totalorder %s8, 3
    %p107 = pnand %p105, %p106
    %p108 = pneg %p107
    // Predicated region
    $region9: #{conv_block_forward.1} parent=5 // pred_check
      _
    $region10: #{conv_block_forward.1} parent=5 // pred_check_branch
      %110 = sbr.rel (%p107) target = $region12
    $region11: #{conv_block_forward.1} parent=5 // pred_region
      %s111 = ssub.s32 %s8, 1
      // Predicated region
      $region13: #{conv_block_forward.1} parent=11 // pred_check
        %p112 = pneg %p69
      $region14: #{conv_block_forward.1} parent=11 // pred_check_branch
        %114 = sbr.rel (%p112) target = $region16
      $region15: #{conv_block_forward.1} parent=11 // pred_region
        _
      $region16: #{conv_block_forward.1} parent=11 // pred_fallthru
        _
    $region12: #{conv_block_forward.1} parent=5 // pred_fallthru
      _
    %p115 = scmp.lt.s32.totalorder %s8, 2
    // Predicated region
    $region17: #{conv_block_forward.1} parent=5 // pred_check
      %p116 = pneg %p115
    $region18: #{conv_block_forward.1} parent=5 // pred_check_branch
      %118 = sbr.rel (%p116) target = $region20
    $region19: #{conv_block_forward.1} parent=5 // pred_region
      // Predicated region
      $region21: #{conv_block_forward.1} parent=19 // pred_check
        %p119 = pneg %p42
      $region22: #{conv_block_forward.1} parent=19 // pred_check_branch
        %121 = sbr.rel (%p119) target = $region24
      $region23: #{conv_block_forward.1} parent=19 // pred_region
        %s122 = smul.u32 2, %s16
        %p123 = scmp.lt.s32.totalorder %s15, 1
        %s124 = scalar_select %p123, %s15, 1
        %p125 = scmp.lt.s32.totalorder %s122, 1
        %s126 = scalar_select %p125, %s122, 1
        %s127 = smul.addr %s124, 10
        %s128 = sadd.s32 %s126, %s127
        %s129 = smul.addr %s128, 4
        %s130 = scalar_lea.vmem %s0, %s129
        %s131 = smul.u32 2, %s16
      $region24: #{conv_block_forward.1} parent=19 // pred_fallthru
        _
    $region20: #{conv_block_forward.1} parent=5 // pred_fallthru
      _
    %p132 = scmp.le.s32.totalorder 1, %s8
    %p133 = scmp.lt.s32.totalorder %s8, 3
    %p134 = pnand %p132, %p133
    %p135 = pneg %p134
    // Predicated region
    $region25: #{conv_block_forward.1} parent=5 // pred_check
      _
    $region26: #{conv_block_forward.1} parent=5 // pred_check_branch
      %137 = sbr.rel (%p134) target = $region28
    $region27: #{conv_block_forward.1} parent=5 // pred_region
      %s138 = ssub.s32 %s8, 1
      %s139 = smul.u32 2, %s18
      %p140 = scmp.lt.s32.totalorder %s17, 1
      %s141 = scalar_select %p140, %s17, 1
      %p142 = scmp.lt.s32.totalorder %s139, 1
      %s143 = scalar_select %p142, %s139, 1
      %s144 = smul.addr %s141, 10
      %s145 = sadd.s32 %s143, %s144
      %s146 = smul.addr %s145, 4
      %s147 = scalar_lea.vmem %s0, %s146
      %p148 = pneg %p48
      %p149 = pneg %p45
      %p150 = pneg %p69
      %p151 = pneg %p66
      %p152 = pneg %p97
      %p153 = pneg %p94
      %s154 = smul.u32 2, %s18
      %p155 = scmp.lt.s32.totalorder %s17, 1
      %s156 = scalar_select %p155, %s17, 1
      %p157 = scmp.lt.s32.totalorder %s154, 1
      %s158 = scalar_select %p157, %s154, 1
      %s159 = smul.addr %s156, 2
      %s160 = sadd.s32 %s158, %s159
      %s161 = smul.addr %s160, 8
      %s162 = scalar_lea.vmem %s2, %s161
      %s163 = smul.u32 2, %s18
      %p164 = scmp.lt.s32.totalorder %s17, 1
      %s165 = scalar_select %p164, %s17, 1
      %p166 = scmp.lt.s32.totalorder %s163, 1
      %s167 = scalar_select %p166, %s163, 1
      %s168 = smul.addr %s165, 10
      %s169 = sadd.s32 %s167, %s168
      %s170 = smul.addr %s169, 4
      %s171 = scalar_lea.vmem %s0, %s170
      %s172 = smul.u32 2, %s18
      %s173 = smul.u32 2, %s18
      %p174 = scmp.lt.s32.totalorder %s17, 1
      %s175 = scalar_select %p174, %s17, 1
      %p176 = scmp.lt.s32.totalorder %s173, 1
      %s177 = scalar_select %p176, %s173, 1
      %s178 = smul.addr %s175, 2
      %s179 = sadd.s32 %s177, %s178
      %s180 = smul.addr %s179, 8
      %s181 = scalar_lea.vmem %s2, %s180
      %s182 = smul.u32 2, %s18
      %v184 = vld [vmem:[%s1] sm:$0xf]
      %v185 = vld [vmem:[%s171] sm:$0xff]
      %v186 = vld [vmem:[%s171 + $0x8] sm:$0xff]
      %v187 = vld [vmem:[%s171 + $0x10] sm:$0xff]
      %v188 = vld [vmem:[%s171 + $0x18] sm:$0xff]
      %v189 = vld [vmem:[%s171 + $0x20] sm:$0x77]
      %v195 = vunpack.c.l.b16 %v185
      %v196 = vunpack.c.h.b16 %v185
      %v197 = vunpack.c.l.b16 %v186
      %v198 = vunpack.c.h.b16 %v186
      %v199 = vunpack.c.l.b16 %v187
      %v200 = vunpack.c.h.b16 %v187
      %v201 = vunpack.c.l.b16 %v188
      %v202 = vunpack.c.h.b16 %v188
      %v203 = vunpack.c.l.b16 %v189
      %v204 = vunpack.c.h.b16 %v189
      %v205 = vpack.c.b16 %v197, %v195
      %v206 = vpack.c.b16 %v198, %v196
      %v207 = vpack.c.b16 %v201, %v199
      %v208 = vpack.c.b16 %v202, %v200
      %v209 = vpack.c.b16 %v203, %v203
      %v210 = vpack.c.b16 %v204, %v204
      %vm215 = vcmask 302080
      %v217 = vsel %vm215, %v184, 0
      %vm219 = vcmask 1041408
      %vm220 = vcmask 1042432
      %v221 = vsel %vm219, 4294967295, 65535
      %v222 = vsel %vm220, %v221, 0
      %v224 = vand.u32 %v209, %v222
      %v227 = vand.u32 %v210, %v222
      %229 = vmatprep.subr.bf16.mxu0 %v206
      %230 = vmatpush1.bf16.msra.mxu0 %v205
      %231 = vmatprep.subr.bf16.mxu0 %v208
      %232 = vmatpush1.bf16.msra.mxu0 %v207
      %233 = vmatprep.subr.bf16.mxu0 %v227
      %234 = vmatpush1.bf16.msra.mxu0 %v224
      %235 = vmatprep.subr.bf16.mxu0 0
      %236 = vmatpush1.bf16.msra.mxu0 0
      %237 = vmatprep.subr.bf16.mxu0 0
      %238 = vmatpush1.bf16.msra.mxu0 0
      %239 = vmatprep.subr.bf16.mxu0 0
      %240 = vmatpush1.bf16.msra.mxu0 0
      %241 = vmatprep.subr.bf16.mxu0 0
      %242 = vmatpush1.bf16.msra.mxu0 0
      %243 = vmatprep.subr.bf16.mxu0 0
      %244 = vmatpush1.bf16.msra.mxu0 0
      %245 = vmatprep.subr.bf16.mxu0 0
      %246 = vmatpush1.bf16.msra.mxu0 0
      %247 = vmatprep.subr.bf16.mxu0 0
      %248 = vmatpush1.bf16.msra.mxu0 0
      %249 = vmatprep.subr.bf16.mxu0 0
      %250 = vmatpush1.bf16.msra.mxu0 0
      %251 = vmatprep.subr.bf16.mxu0 0
      %252 = vmatpush1.bf16.msra.mxu0 0
      %253 = vmatprep.subr.bf16.mxu0 0
      %254 = vmatpush1.bf16.msra.mxu0 0
      %255 = vmatprep.subr.bf16.mxu0 0
      %256 = vmatpush1.bf16.msra.mxu0 0
      %257 = vmatprep.subr.bf16.mxu0 0
      %258 = vmatpush1.bf16.msra.mxu0 0
      %259 = vmatprep.subr.bf16.mxu0 0
      %260 = vmatpush1.bf16.msra.mxu0 0
      %261 = vmatprep.mubr.bf16.mxu0 0
      %262 = vmatmul.mubr.bf16.gmra.mrb[0].mxu0 %v217
      %v263 = vpop.f32.mrb[0].mxu0
      %v264 = vadd.f32 0.0, %v263
      %v265 = vpop.f32.mrb[0].mxu0
      %v266 = vadd.f32 0.0, %v265
      %v267 = vpop.f32.mrb[0].mxu0
      %v268 = vpop.f32.mrb[0].mxu0
      %269 = vdwg.mxu0
      %v270 = vmax.f32 %v264, 0.0
      %v271 = vmax.f32 %v266, 0.0
      %272 = vst [vmem:[%s181] sm:$0xff] %v270
      %273 = vst [vmem:[%s181 + $0x8] sm:$0xff] %v271
      %s274 = smul.u32 2, %s18
      %p275 = scmp.lt.s32.totalorder %s17, 1
      %s276 = scalar_select %p275, %s17, 1
      %p277 = scmp.lt.s32.totalorder %s274, 1
      %s278 = scalar_select %p277, %s274, 1
      %s279 = smul.addr %s276, 2
      %s280 = sadd.s32 %s278, %s279
      %s281 = smul.addr %s280, 8
      %s282 = scalar_lea.vmem %s2, %s281
      // Predicated region
      $region29: #{conv_block_forward.1} parent=27 // pred_check
        %p283 = pneg %p94
      $region30: #{conv_block_forward.1} parent=27 // pred_check_branch
        %285 = sbr.rel (%p283) target = $region32
      $region31: #{conv_block_forward.1} parent=27 // pred_region
        %s286 = smul.u32 2, %s18
      $region32: #{conv_block_forward.1} parent=27 // pred_fallthru
        _
    $region28: #{conv_block_forward.1} parent=5 // pred_fallthru
      _
    %p287 = scmp.le.s32.totalorder 2, %s8
    // Predicated region
    $region33: #{conv_block_forward.1} parent=5 // pred_check
      %p288 = pneg %p287
    $region34: #{conv_block_forward.1} parent=5 // pred_check_branch
      %290 = sbr.rel (%p288) target = $region36
    $region35: #{conv_block_forward.1} parent=5 // pred_region
      %s291 = ssub.s32 %s8, 2
      // Predicated region
      $region37: #{conv_block_forward.1} parent=35 // pred_check
        %p292 = pneg %p100
      $region38: #{conv_block_forward.1} parent=35 // pred_check_branch
        %294 = sbr.rel (%p292) target = $region40
      $region39: #{conv_block_forward.1} parent=35 // pred_region
        %s295 = smul.u32 2, %s20
        %p296 = scmp.lt.s32.totalorder %s19, 1
        %s297 = scalar_select %p296, %s19, 1
        %p298 = scmp.lt.s32.totalorder %s295, 1
        %s299 = scalar_select %p298, %s295, 1
        %s300 = smul.addr %s297, 2
        %s301 = sadd.s32 %s299, %s300
        %s302 = smul.addr %s301, 8
        %s303 = scalar_lea.vmem %s2, %s302
      $region40: #{conv_block_forward.1} parent=35 // pred_fallthru
        _
    $region36: #{conv_block_forward.1} parent=5 // pred_fallthru
      _
  $region6: #{conv_block_forward.1} parent=0 // loop_footer
    %s12 = sadd.s32 1, %s8
  $region7: #{conv_block_forward.1} parent=0 // loop_footer_branch
    %7 = sbr.rel target = $region3
  $region8: #{conv_block_forward.1} parent=0 // loop_exit
    _

</llo_original>
